<compile_context>
chip_gen: v7x
topology: tpu7x:2x2x1
jax: 0.10.0
libtpu: 0.0.40
codegen_flags: <defaults>
</compile_context>

<pallas_src>
import math

import jax
import jax.numpy as jnp
from jax.experimental import pallas as pl
from jax.experimental.pallas import tpu as pltpu


def _round_up(x, m):
    return ((x + m - 1) // m) * m


def _lora_linear_kernel(x_ref, wt_ref, u_ref, bt_ref, bias_ref, o_ref, acc_ref):
    """One (i, j, k) grid step of y = x @ W.T + u @ B.T + bias."""
    k = pl.program_id(2)

    @pl.when(k == 0)
    def _init():
        acc_ref[...] = jnp.zeros_like(acc_ref)

    # Dense path: native-dtype operands into the MXU, f32 accumulation.
    acc_ref[...] += jnp.dot(x_ref[...], wt_ref[...],
                            preferred_element_type=jnp.float32)

    @pl.when(k == pl.num_programs(2) - 1)
    def _finalize():
        # LoRA correction: (tm, rank) @ (rank, tn), native dtype, once per (i, j).
        lora = jnp.dot(u_ref[...], bt_ref[...],
                       preferred_element_type=jnp.float32)
        y = acc_ref[...] + lora + bias_ref[...].astype(jnp.float32)
        o_ref[...] = y.astype(o_ref.dtype)
    # TODO(synk): dropout(p=0.5) in the PyTorch module is train-time stochastic;
    # this kernel implements the eval-mode forward (identity). Training dropout
    # would mask in the finalize block with pltpu.prng_seed + prng_random_bits.


def lora_linear_forward(x, weight, lora_b, lora_a, bias, *,
                        lora_alpha=16, rank=16,
                        tm_target=512, tn_target=512, tk_target=1024,
                        compute_dtype=None):
    """x: (..., in_features) -> (..., out_features).

    compute_dtype: optional dtype (e.g. jnp.bfloat16) for the MXU operands;
    accumulation is always f32 and the output keeps x.dtype.
    """
    out_features, in_features = weight.shape
    assert lora_b.shape == (out_features, rank)
    assert lora_a.shape == (rank, in_features)
    scale = float(lora_alpha) / float(rank)

    out_dtype = x.dtype
    cdtype = jnp.dtype(compute_dtype) if compute_dtype is not None else jnp.dtype(x.dtype)
    dtype_bytes = cdtype.itemsize
    # Sublane packing per compute dtype: 8 for f32, 16 for bf16, 32 for int8/fp8.
    packing = max(8, 32 // dtype_bytes)

    lead_shape = x.shape[:-1]
    m = 1
    for d in lead_shape:
        m *= int(d)
    x2d = x.reshape(m, in_features).astype(cdtype)

    # Pre-transpose in the wrapper (no in-kernel XLU transpose); fold scale into A.
    wt = weight.T.astype(cdtype)                                           # (in, out)
    at = (lora_a * jnp.asarray(scale, lora_a.dtype)).T.astype(cdtype)      # (in, rank)
    bt = lora_b.T.astype(cdtype)                                           # (rank, out)
    bias2d = bias.reshape(1, out_features).astype(cdtype)

    # Tile sizes: lane-dense (128-multiple) N/K tiles, packed-sublane-aligned M tiles.
    n128 = _round_up(out_features, 128)
    k128 = _round_up(in_features, 128)
    tm = min(tm_target, _round_up(m, packing))
    tn = min(tn_target, n128)
    tk = min(tk_target, k128)

    # v7x decode regime: with a single M tile, split the N axis into >=2 parallel
    # programs (when the padded N allows it) so both TensorCores get work.
    if m <= tm and n128 // tn < 2 and n128 >= 256:
        half = n128 // 2
        if half % 128 == 0:
            tn = half

    mp = _round_up(m, tm)
    np_ = _round_up(out_features, tn)
    kp = _round_up(in_features, tk)

    # Zero-pad to tile multiples (zeros contribute nothing; sliced off below).
    x2d = jnp.pad(x2d, ((0, mp - m), (0, kp - in_features)))
    wt = jnp.pad(wt, ((0, kp - in_features), (0, np_ - out_features)))
    at = jnp.pad(at, ((0, kp - in_features), (0, 0)))
    bt = jnp.pad(bt, ((0, 0), (0, np_ - out_features)))
    bias2d = jnp.pad(bias2d, ((0, 0), (0, np_ - out_features)))

    # LoRA intermediate, hoisted out of the kernel: u = x @ (scale*A).T, (mp, rank).
    # f32 accumulation, then cast back to the MXU operand dtype for the finalize dot.
    u = jnp.dot(x2d, at, preferred_element_type=jnp.float32).astype(cdtype)

    num_i, num_j, num_k = mp // tm, np_ // tn, kp // tk
    grid = (num_i, num_j, num_k)

    # Advisory cost: account for re-streaming (x once per N tile, W once per M tile).
    flops = 2 * mp * kp * np_ + 2 * mp * rank * np_
    bytes_accessed = dtype_bytes * (x2d.size * num_j + wt.size * num_i
                                    + (u.size + bt.size + bias2d.size) * num_j
                                    + mp * np_)

    # Per-generation VMEM budget: ~double-buffered tiles + f32 accumulator with
    # headroom, capped by the chip's physical VMEM (64 MiB on v7x, 128 on v5e/v6e).
    try:
        vmem_cap = int(pltpu.get_tpu_info().vmem_capacity_bytes)
    except Exception:
        vmem_cap = 64 << 20
    cap = min(int(0.75 * vmem_cap), 100 << 20)
    tile_bytes = dtype_bytes * 2 * (tm * tk + tk * tn + tm * rank + rank * tn
                                    + tn + tm * tn) + 4 * tm * tn
    vmem_limit = min(max(int(1.5 * tile_bytes) + (4 << 20), 32 << 20), cap)

    out = pl.pallas_call(
        _lora_linear_kernel,
        out_shape=jax.ShapeDtypeStruct((mp, np_), out_dtype),
        grid_spec=pltpu.PrefetchScalarGridSpec(
            num_scalar_prefetch=0,
            grid=grid,
            in_specs=[
                pl.BlockSpec((tm, tk), lambda i, j, k: (i, k)),      # x
                pl.BlockSpec((tk, tn), lambda i, j, k: (k, j)),      # W.T
                pl.BlockSpec((tm, rank), lambda i, j, k: (i, 0)),    # u (resident over k)
                pl.BlockSpec((rank, tn), lambda i, j, k: (0, j)),    # B.T (resident over k)
                pl.BlockSpec((1, tn), lambda i, j, k: (0, j)),       # bias (resident over k)
            ],
            out_specs=pl.BlockSpec((tm, tn), lambda i, j, k: (i, j)),
            scratch_shapes=[
                pltpu.VMEM((tm, tn), jnp.float32),    # dense-path accumulator
            ],
        ),
        compiler_params=pltpu.CompilerParams(
            dimension_semantics=("parallel", "parallel", "arbitrary"),
            vmem_limit_bytes=int(vmem_limit),
        ),
        cost_estimate=pl.CostEstimate(flops=int(flops), transcendentals=0,
                                      bytes_accessed=int(bytes_accessed)),
    )(x2d, wt, u, bt, bias2d)

    out = out[:m, :out_features]
    return out.reshape(*lead_shape, out_features)


def init_lora_linear_params(key, in_features, out_features, rank):
    """Deterministic init matching the PyTorch module's __init__ / initial_weights."""
    k_w, k_bias, k_a = jax.random.split(key, 3)
    # nn.Linear default: kaiming_uniform_(a=sqrt(5)) -> U(-1/sqrt(fan_in), 1/sqrt(fan_in))
    wb = 1.0 / math.sqrt(in_features)
    weight = jax.random.uniform(k_w, (out_features, in_features),
                                minval=-wb, maxval=wb, dtype=jnp.float32)
    bias = jax.random.uniform(k_bias, (out_features,),
                              minval=-wb, maxval=wb, dtype=jnp.float32)
    # lora_a: kaiming_uniform_(a=sqrt(5)) on (rank, in_features) -> same bound formula
    ab = 1.0 / math.sqrt(in_features)
    lora_a = jax.random.uniform(k_a, (rank, in_features),
                                minval=-ab, maxval=ab, dtype=jnp.float32)
    # lora_b: zeros
    lora_b = jnp.zeros((out_features, rank), dtype=jnp.float32)
    return weight, bias, lora_a, lora_b


if __name__ == "__main__":
    key = jax.random.PRNGKey(0)
    k_params, k_x = jax.random.split(key)

    batch, seq = 2, 8
    in_features, out_features, rank, lora_alpha = 32, 32, 16, 16

    weight, bias, lora_a, lora_b = init_lora_linear_params(
        k_params, in_features, out_features, rank)
    # Make lora_b nonzero so the LoRA path is actually exercised in the check.
    lora_b = 0.01 * jax.random.normal(jax.random.PRNGKey(1),
                                      (out_features, rank), dtype=jnp.float32)

    x = jax.random.normal(k_x, (batch, seq, in_features), dtype=jnp.float32)

    # Reference in plain JAX (same semantics as the PyTorch forward, eval mode).
    scale = lora_alpha / rank
    w_eff = weight + scale * (lora_b @ lora_a)
    y_ref = x @ w_eff.T + bias

    # 1) Native f32 compute path (exact-ish check).
    y = lora_linear_forward(x, weight, lora_b, lora_a, bias,
                            lora_alpha=lora_alpha, rank=rank)
    y = jax.block_until_ready(y)
    assert y.shape == (batch, seq, out_features)
    assert jnp.allclose(y, y_ref, atol=1e-4, rtol=1e-5), float(
        jnp.max(jnp.abs(y - y_ref)))

    # 2) bf16 MXU-operand path (f32 accumulation) -- loose tolerance check.
    y_bf = lora_linear_forward(x, weight, lora_b, lora_a, bias,
                               lora_alpha=lora_alpha, rank=rank,
                               compute_dtype=jnp.bfloat16)
    y_bf = jax.block_until_ready(y_bf)
    assert y_bf.shape == (batch, seq, out_features)
    assert jnp.allclose(y_bf, y_ref, atol=5e-2, rtol=5e-2), float(
        jnp.max(jnp.abs(y_bf - y_ref)))

    print("KERNEL_OK")
</pallas_src>

<mosaic_0001>
module attributes {stable_mosaic.version = 11 : i64} {
  func.func @_lora_linear_kernel(%arg0: i32, %arg1: i32, %arg2: i32, %arg3: memref<16x128xf32, #tpu.memory_space<vmem>>, %arg4: memref<128x128xf32, #tpu.memory_space<vmem>>, %arg5: memref<16x16xf32, #tpu.memory_space<vmem>>, %arg6: memref<16x128xf32, #tpu.memory_space<vmem>>, %arg7: memref<1x128xf32, #tpu.memory_space<vmem>>, %arg8: memref<16x128xf32, #tpu.memory_space<vmem>>, %arg9: memref<16x128xf32, #tpu.memory_space<vmem>>) attributes {dimension_semantics = [#tpu.dimension_semantics<parallel>, #tpu.dimension_semantics<parallel>, #tpu.dimension_semantics<arbitrary>], iteration_bounds = array<i64: 1, 1, 1>, scalar_prefetch = 0 : i64, scratch_operands = 1 : i64, tpu.core_type = #tpu.core_type<tc>, window_params = [{transform_indices = @transform_0, window_bounds = array<i64: 16, 128>}, {transform_indices = @transform_1, window_bounds = array<i64: 128, 128>}, {transform_indices = @transform_2, window_bounds = array<i64: 16, 16>}, {transform_indices = @transform_3, window_bounds = array<i64: 16, 128>}, {transform_indices = @transform_4, window_bounds = array<i64: 1, 128>}, {transform_indices = @transform_5, window_bounds = array<i64: 16, 128>}]} {
    %c0_i32 = arith.constant 0 : i32
    %0 = arith.cmpi eq, %arg2, %c0_i32 : i32
    %1 = arith.extui %0 : i1 to i32
    %c0_i32_0 = arith.constant 0 : i32
    %2 = arith.cmpi ne, %1, %c0_i32_0 : i32
    scf.if %2 {
      %cst_10 = arith.constant 0.000000e+00 : f32
      %12 = vector.broadcast %cst_10 : f32 to vector<16x128xf32>
      %c0_11 = arith.constant 0 : index
      %c0_12 = arith.constant 0 : index
      %13 = vector.load %arg9[%c0_11, %c0_12] : memref<16x128xf32, #tpu.memory_space<vmem>>, vector<16x128xf32>
      tpu.vector_store %arg9[%c0_11, %c0_12], %12 {strides = array<i32>} : memref<16x128xf32, #tpu.memory_space<vmem>>, vector<16x128xf32>,
    } else {
    }
    %c0 = arith.constant 0 : index
    %c0_1 = arith.constant 0 : index
    %3 = vector.load %arg9[%c0, %c0_1] : memref<16x128xf32, #tpu.memory_space<vmem>>, vector<16x128xf32>
    %c0_2 = arith.constant 0 : index
    %c0_3 = arith.constant 0 : index
    %4 = vector.load %arg3[%c0_2, %c0_3] : memref<16x128xf32, #tpu.memory_space<vmem>>, vector<16x128xf32>
    %c0_4 = arith.constant 0 : index
    %c0_5 = arith.constant 0 : index
    %5 = vector.load %arg4[%c0_4, %c0_5] : memref<128x128xf32, #tpu.memory_space<vmem>>, vector<128x128xf32>
    %cst = arith.constant dense<0.000000e+00> : vector<16x128xf32>
    %6 = tpu.matmul %4, %5, %cst {dimension_numbers = #tpu.dot_dimension_numbers<[1], [0], [0], [1], [0, 0, 1, 1], [], []>} : vector<16x128xf32>, vector<128x128xf32>, vector<16x128xf32> -> vector<16x128xf32>
    %7 = arith.addf %3, %6 : vector<16x128xf32>
    %c0_6 = arith.constant 0 : index
    %c0_7 = arith.constant 0 : index
    %8 = vector.load %arg9[%c0_6, %c0_7] : memref<16x128xf32, #tpu.memory_space<vmem>>, vector<16x128xf32>
    tpu.vector_store %arg9[%c0_6, %c0_7], %7 {strides = array<i32>} : memref<16x128xf32, #tpu.memory_space<vmem>>, vector<16x128xf32>,
    %c0_i32_8 = arith.constant 0 : i32
    %9 = arith.cmpi eq, %arg2, %c0_i32_8 : i32
    %10 = arith.extui %9 : i1 to i32
    %c0_i32_9 = arith.constant 0 : i32
    %11 = arith.cmpi ne, %10, %c0_i32_9 : i32
    scf.if %11 {
      %c0_10 = arith.constant 0 : index
      %c0_11 = arith.constant 0 : index
      %12 = vector.load %arg5[%c0_10, %c0_11] : memref<16x16xf32, #tpu.memory_space<vmem>>, vector<16x16xf32>
      %c0_12 = arith.constant 0 : index
      %c0_13 = arith.constant 0 : index
      %13 = vector.load %arg6[%c0_12, %c0_13] : memref<16x128xf32, #tpu.memory_space<vmem>>, vector<16x128xf32>
      %cst_14 = arith.constant dense<0.000000e+00> : vector<16x128xf32>
      %14 = tpu.matmul %12, %13, %cst_14 {dimension_numbers = #tpu.dot_dimension_numbers<[1], [0], [0], [1], [0, 0, 1, 1], [], []>} : vector<16x16xf32>, vector<16x128xf32>, vector<16x128xf32> -> vector<16x128xf32>
      %c0_15 = arith.constant 0 : index
      %c0_16 = arith.constant 0 : index
      %15 = vector.load %arg9[%c0_15, %c0_16] : memref<16x128xf32, #tpu.memory_space<vmem>>, vector<16x128xf32>
      %16 = arith.addf %15, %14 : vector<16x128xf32>
      %c0_17 = arith.constant 0 : index
      %c0_18 = arith.constant 0 : index
      %17 = vector.load %arg7[%c0_17, %c0_18] : memref<1x128xf32, #tpu.memory_space<vmem>>, vector<1x128xf32>
      %18 = vector.broadcast %17 : vector<1x128xf32> to vector<16x128xf32>
      %19 = arith.addf %16, %18 : vector<16x128xf32>
      %c0_19 = arith.constant 0 : index
      %c0_20 = arith.constant 0 : index
      %20 = vector.load %arg8[%c0_19, %c0_20] : memref<16x128xf32, #tpu.memory_space<vmem>>, vector<16x128xf32>
      tpu.vector_store %arg8[%c0_19, %c0_20], %19 {strides = array<i32>} : memref<16x128xf32, #tpu.memory_space<vmem>>, vector<16x128xf32>,
    } else {
    }
    return
  }
  func.func @transform_0(%arg0: i32, %arg1: i32, %arg2: i32) -> (i32, i32) {
    %c0_i32 = arith.constant 0 : i32
    return %arg0, %arg2 : i32, i32
  }
  func.func @transform_1(%arg0: i32, %arg1: i32, %arg2: i32) -> (i32, i32) {
    %c0_i32 = arith.constant 0 : i32
    return %arg2, %arg1 : i32, i32
  }
  func.func @transform_2(%arg0: i32, %arg1: i32, %arg2: i32) -> (i32, i32) {
    %c0_i32 = arith.constant 0 : i32
    %c0_i32_0 = arith.constant 0 : i32
    return %arg0, %c0_i32 : i32, i32
  }
  func.func @transform_3(%arg0: i32, %arg1: i32, %arg2: i32) -> (i32, i32) {
    %c0_i32 = arith.constant 0 : i32
    %c0_i32_0 = arith.constant 0 : i32
    return %c0_i32, %arg1 : i32, i32
  }
  func.func @transform_4(%arg0: i32, %arg1: i32, %arg2: i32) -> (i32, i32) {
    %c0_i32 = arith.constant 0 : i32
    %c0_i32_0 = arith.constant 0 : i32
    return %c0_i32, %arg1 : i32, i32
  }
  func.func @transform_5(%arg0: i32, %arg1: i32, %arg2: i32) -> (i32, i32) {
    %c0_i32 = arith.constant 0 : i32
    return %arg0, %arg1 : i32, i32
  }
}

</mosaic_0001>

<llo_original>
// kernel: tpu_custom_call.1
$region0: #{tpu_custom_call.1}
  #allocation0 [shape = 'u32[]', space=smem, size = 0x4, offset = 0x4, fixed_abs, tag = 'smem constant byte address 0x4 - core index']
  #allocation1 [shape = 'u32[144,128]{1,0:T(1,128)}', space=vmem, size = 0x12000, scoped, tag = 'internal scratch']
  #allocation2 [shape = 'f32[16,128]{1,0:T(8,128)}', space=vmem, size = 0x2000, scoped, tag = 'scratch operand']
  %s0 = inlined_call_operand.hbm [shape: f32[16,128], index: 0, kind: input, shape index: {}]
  %s1 = inlined_call_operand.hbm [shape: f32[128,128], index: 1, kind: input, shape index: {}]
  %s2 = inlined_call_operand.hbm [shape: f32[16,16], index: 2, kind: input, shape index: {}]
  %s3 = inlined_call_operand.hbm [shape: f32[16,128], index: 3, kind: input, shape index: {}]
  %s4 = inlined_call_operand.vmem [shape: f32[1,128], index: 4, kind: input, shape index: {}]
  %s5 = inlined_call_operand.hbm [shape: f32[16,128], index: 5, kind: output, shape index: {}]
  %s6 = sld [smem:[#allocation0]]
  $region54: #{tpu_custom_call.1} parent=0
    _
  %s8 = ssub.s32 1, %s6
  %s9 = scalar_select 0, %s8, %s6
  $region1: #{tpu_custom_call.1} parent=0
    #allocation3 [shape = 'u8[8192]{0}', space=vmem, size = 0x2000, scoped, tag = 'input window, operand 0, single buffered']
    #allocation4 [shape = 's32[1]{0}', space=sflag, size = 0x4, scoped, tag = 'scoped memory for tpu_custom_call.1']
    #allocation5 [shape = 's32[1]{0}', space=sflag, size = 0x4, scoped, tag = 'scoped memory for tpu_custom_call.1']
    #allocation6 [shape = 'u8[65536]{0}', space=vmem, size = 0x10000, scoped, tag = 'input window, operand 1, single buffered']
    #allocation7 [shape = 's32[1]{0}', space=sflag, size = 0x4, scoped, tag = 'scoped memory for tpu_custom_call.1']
    #allocation8 [shape = 'u8[8192]{0}', space=vmem, size = 0x2000, scoped, tag = 'input window, operand 2, single buffered']
    #allocation9 [shape = 'u8[8192]{0}', space=vmem, size = 0x2000, scoped, tag = 'input window, operand 3, single buffered']
    #allocation10 [shape = 's32[1]{0}', space=sflag, size = 0x4, scoped, tag = 'scoped memory for tpu_custom_call.1']
    #allocation11 [shape = 'u8[8192]{0}', space=vmem, size = 0x2000, scoped, tag = 'output window, operand 0, single buffered']
    %10 = vsyncpa [#allocation4], 0
    %11 = vsyncpa [#allocation7], 0
    %12 = vsyncpa [#allocation10], 0
    %13 = vsyncpa [#allocation5], 0
    // Predicated region
    $region2: #{tpu_custom_call.1} parent=1 // pred_check
      _
    $region3: #{tpu_custom_call.1} parent=1 // pred_check_branch
      %15 = sbr.rel (0) target = $region5
    $region4: #{tpu_custom_call.1} parent=1 // pred_region
      %s17 = ssub.s32 256, 256
      %18 = vsyncadd [#allocation4], %s17
      %s19 = sshll.u32 [#allocation3], 4
      %s20 = int_to_ptr.vmem [resolvable:$true] %s19
      %25 = dma.hbm_to_vmem [thread:$0]  %s0, 256, %s20, [#allocation4], 128, 128, 8
    $region5: #{tpu_custom_call.1} parent=1 // pred_fallthru
      _
    // Predicated region
    $region6: #{tpu_custom_call.1} parent=1 // pred_check
      _
    $region7: #{tpu_custom_call.1} parent=1 // pred_check_branch
      %27 = sbr.rel (0) target = $region9
    $region8: #{tpu_custom_call.1} parent=1 // pred_region
      %s29 = ssub.s32 2048, 2048
      %30 = vsyncadd [#allocation7], %s29
      %s31 = sshll.u32 [#allocation6], 4
      %s32 = int_to_ptr.vmem [resolvable:$true] %s31
      %37 = dma.hbm_to_vmem [thread:$0]  %s1, 2048, %s32, [#allocation7], 128, 128, 8
    $region9: #{tpu_custom_call.1} parent=1 // pred_fallthru
      _
    // Predicated region
    $region10: #{tpu_custom_call.1} parent=1 // pred_check
      _
    $region11: #{tpu_custom_call.1} parent=1 // pred_check_branch
      %39 = sbr.rel (0) target = $region13
    $region12: #{tpu_custom_call.1} parent=1 // pred_region
      %s41 = ssub.s32 256, 256
      %42 = vsyncadd [#allocation7], %s41
      %s43 = sshll.u32 [#allocation8], 4
      %s44 = int_to_ptr.vmem [resolvable:$true] %s43
      %49 = dma.hbm_to_vmem [thread:$0]  %s2, 256, %s44, [#allocation7], 128, 128, 8
    $region13: #{tpu_custom_call.1} parent=1 // pred_fallthru
      _
    // Predicated region
    $region14: #{tpu_custom_call.1} parent=1 // pred_check
      _
    $region15: #{tpu_custom_call.1} parent=1 // pred_check_branch
      %51 = sbr.rel (0) target = $region17
    $region16: #{tpu_custom_call.1} parent=1 // pred_region
      %s53 = ssub.s32 256, 256
      %54 = vsyncadd [#allocation10], %s53
      %s55 = sshll.u32 [#allocation9], 4
      %s56 = int_to_ptr.vmem [resolvable:$true] %s55
      %61 = dma.hbm_to_vmem [thread:$0]  %s3, 256, %s56, [#allocation10], 128, 128, 8
    $region17: #{tpu_custom_call.1} parent=1 // pred_fallthru
      _
    // Predicated region
    $region18: #{tpu_custom_call.1} parent=1 // pred_check
      _
    $region19: #{tpu_custom_call.1} parent=1 // pred_check_branch
      %63 = sbr.rel (0) target = $region21
    $region20: #{tpu_custom_call.1} parent=1 // pred_region
      _
    $region21: #{tpu_custom_call.1} parent=1 // pred_fallthru
      _
    // Predicated region
    $region22: #{tpu_custom_call.1} parent=1 // pred_check
      _
    $region23: #{tpu_custom_call.1} parent=1 // pred_check_branch
      %65 = sbr.rel (0) target = $region25
    $region24: #{tpu_custom_call.1} parent=1 // pred_region
      %66 = dma.done [#allocation4], 256
    $region25: #{tpu_custom_call.1} parent=1 // pred_fallthru
      _
    // Predicated region
    $region26: #{tpu_custom_call.1} parent=1 // pred_check
      _
    $region27: #{tpu_custom_call.1} parent=1 // pred_check_branch
      %68 = sbr.rel (0) target = $region29
    $region28: #{tpu_custom_call.1} parent=1 // pred_region
      %69 = dma.done [#allocation7], 2048
    $region29: #{tpu_custom_call.1} parent=1 // pred_fallthru
      _
    // Predicated region
    $region30: #{tpu_custom_call.1} parent=1 // pred_check
      _
    $region31: #{tpu_custom_call.1} parent=1 // pred_check_branch
      %71 = sbr.rel (0) target = $region33
    $region32: #{tpu_custom_call.1} parent=1 // pred_region
      %72 = dma.done [#allocation7], 256
    $region33: #{tpu_custom_call.1} parent=1 // pred_fallthru
      _
    // Predicated region
    $region34: #{tpu_custom_call.1} parent=1 // pred_check
      _
    $region35: #{tpu_custom_call.1} parent=1 // pred_check_branch
      %74 = sbr.rel (0) target = $region37
    $region36: #{tpu_custom_call.1} parent=1 // pred_region
      %75 = dma.done [#allocation10], 256
    $region37: #{tpu_custom_call.1} parent=1 // pred_fallthru
      _
    %p76 = scmp.eq.s32.totalorder 0, 0
    // Predicated region
    $region38: #{tpu_custom_call.1} parent=1 // pred_check
      %p77 = pneg %p76
    $region39: #{tpu_custom_call.1} parent=1 // pred_check_branch
      %79 = sbr.rel (%p77) target = $region41
    $region40: #{tpu_custom_call.1} parent=1 // pred_region
      %80 = vst [vmem:[#allocation2] sm:$0xff] 0.0
      %81 = vst [vmem:[#allocation2 + $0x8] sm:$0xff] 0.0
    $region41: #{tpu_custom_call.1} parent=1 // pred_fallthru
      _
    %v82 = vld [vmem:[#allocation2] sm:$0xff]
    %v83 = vld [vmem:[#allocation2 + $0x8] sm:$0xff]
    %v84 = vld [vmem:[#allocation3] sm:$0xff]
    %v85 = vld [vmem:[#allocation3 + $0x8] sm:$0xff]
    %v86 = vld [vmem:[#allocation6] sm:$0xff]
    %v87 = vld [vmem:[#allocation6 + $0x8] sm:$0xff]
    %v88 = vld [vmem:[#allocation6 + $0x10] sm:$0xff]
    %v89 = vld [vmem:[#allocation6 + $0x18] sm:$0xff]
    %v90 = vld [vmem:[#allocation6 + $0x20] sm:$0xff]
    %v91 = vld [vmem:[#allocation6 + $0x28] sm:$0xff]
    %v92 = vld [vmem:[#allocation6 + $0x30] sm:$0xff]
    %v93 = vld [vmem:[#allocation6 + $0x38] sm:$0xff]
    %v94 = vld [vmem:[#allocation6 + $0x40] sm:$0xff]
    %v95 = vld [vmem:[#allocation6 + $0x48] sm:$0xff]
    %v96 = vld [vmem:[#allocation6 + $0x50] sm:$0xff]
    %v97 = vld [vmem:[#allocation6 + $0x58] sm:$0xff]
    %v98 = vld [vmem:[#allocation6 + $0x60] sm:$0xff]
    %v99 = vld [vmem:[#allocation6 + $0x68] sm:$0xff]
    %v100 = vld [vmem:[#allocation6 + $0x70] sm:$0xff]
    %v101 = vld [vmem:[#allocation6 + $0x78] sm:$0xff]
    %102 = vmatprep.subr.mxu0 0.0
    %103 = vmatpush1.msra.mxu0 %v86
    %104 = vmatprep.subr.mxu0 0.0
    %105 = vmatpush1.msra.mxu0 %v87
    %106 = vmatprep.subr.mxu0 0.0
    %107 = vmatpush1.msra.mxu0 %v88
    %108 = vmatprep.subr.mxu0 0.0
    %109 = vmatpush1.msra.mxu0 %v89
    %110 = vmatprep.subr.mxu0 0.0
    %111 = vmatpush1.msra.mxu0 %v90
    %112 = vmatprep.subr.mxu0 0.0
    %113 = vmatpush1.msra.mxu0 %v91
    %114 = vmatprep.subr.mxu0 0.0
    %115 = vmatpush1.msra.mxu0 %v92
    %116 = vmatprep.subr.mxu0 0.0
    %117 = vmatpush1.msra.mxu0 %v93
    %118 = vmatprep.subr.mxu0 0.0
    %119 = vmatpush1.msra.mxu0 %v94
    %120 = vmatprep.subr.mxu0 0.0
    %121 = vmatpush1.msra.mxu0 %v95
    %122 = vmatprep.subr.mxu0 0.0
    %123 = vmatpush1.msra.mxu0 %v96
    %124 = vmatprep.subr.mxu0 0.0
    %125 = vmatpush1.msra.mxu0 %v97
    %126 = vmatprep.subr.mxu0 0.0
    %127 = vmatpush1.msra.mxu0 %v98
    %128 = vmatprep.subr.mxu0 0.0
    %129 = vmatpush1.msra.mxu0 %v99
    %130 = vmatprep.subr.mxu0 0.0
    %131 = vmatpush1.msra.mxu0 %v100
    %132 = vmatprep.subr.mxu0 0.0
    %133 = vmatpush1.msra.mxu0 %v101
    %134 = vmatprep.subr.mxu0 0.0
    %135 = vmatpush1.msra.mxu0 0.0
    %136 = vmatprep.subr.mxu0 0.0
    %137 = vmatpush1.msra.mxu0 0.0
    %138 = vmatprep.subr.mxu0 0.0
    %139 = vmatpush1.msra.mxu0 0.0
    %140 = vmatprep.subr.mxu0 0.0
    %141 = vmatpush1.msra.mxu0 0.0
    %142 = vmatprep.subr.mxu0 0.0
    %143 = vmatpush1.msra.mxu0 0.0
    %144 = vmatprep.subr.mxu0 0.0
    %145 = vmatpush1.msra.mxu0 0.0
    %146 = vmatprep.subr.mxu0 0.0
    %147 = vmatpush1.msra.mxu0 0.0
    %148 = vmatprep.subr.mxu0 0.0
    %149 = vmatpush1.msra.mxu0 0.0
    %150 = vmatprep.subr.mxu0 0.0
    %151 = vmatpush1.msra.mxu0 0.0
    %152 = vmatprep.subr.mxu0 0.0
    %153 = vmatpush1.msra.mxu0 0.0
    %154 = vmatprep.subr.mxu0 0.0
    %155 = vmatpush1.msra.mxu0 0.0
    %156 = vmatprep.subr.mxu0 0.0
    %157 = vmatpush1.msra.mxu0 0.0
    %158 = vmatprep.subr.mxu0 0.0
    %159 = vmatpush1.msra.mxu0 0.0
    %160 = vmatprep.subr.mxu0 0.0
    %161 = vmatpush1.msra.mxu0 0.0
    %162 = vmatprep.subr.mxu0 0.0
    %163 = vmatpush1.msra.mxu0 0.0
    %164 = vmatprep.subr.mxu0 0.0
    %165 = vmatpush1.msra.mxu0 0.0
    %166 = vmatprep.mubr.f32.mxu0 0.0
    %167 = vmatmul.mubr.f32.gmra.mrb[0].mxu0 %v84
    %v168 = vpop.f32.mrb[0].mxu0
    %v169 = vadd.f32 0.0, %v168
    %v170 = vpop.f32.mrb[0].mxu0
    %171 = vmatprep.mubr.f32.mxu0 0.0
    %172 = vmatmul.mubr.f32.gmra.mrb[0].mxu0 %v85
    %v173 = vpop.f32.mrb[0].mxu0
    %v174 = vadd.f32 0.0, %v173
    %v175 = vpop.f32.mrb[0].mxu0
    %176 = vdwg.mxu0
    %v177 = vadd.f32 %v82, %v169
    %v178 = vadd.f32 %v83, %v174
    %179 = vst [vmem:[#allocation2] sm:$0xff] %v177
    %180 = vst [vmem:[#allocation2 + $0x8] sm:$0xff] %v178
    // Predicated region
    $region42: #{tpu_custom_call.1} parent=1 // pred_check
      %p181 = pneg %p76
    $region43: #{tpu_custom_call.1} parent=1 // pred_check_branch
      %183 = sbr.rel (%p181) target = $region45
    $region44: #{tpu_custom_call.1} parent=1 // pred_region
      %v184 = vld [vmem:[#allocation8] sm:$0xff]
      %v185 = vld [vmem:[#allocation8 + $0x8] sm:$0xff]
      %v186 = vld [vmem:[#allocation9] sm:$0xff]
      %v187 = vld [vmem:[#allocation9 + $0x8] sm:$0xff]
      %vm188 = vcmask 130048
      %v190 = vsel %vm188, %v184, 0
      %v193 = vsel %vm188, %v185, 0
      %195 = vmatprep.subr.mxu0 0.0
      %196 = vmatpush1.msra.mxu0 %v186
      %197 = vmatprep.subr.mxu0 0.0
      %198 = vmatpush1.msra.mxu0 %v187
      %199 = vmatprep.subr.mxu0 0.0
      %200 = vmatpush1.msra.mxu0 0.0
      %201 = vmatprep.subr.mxu0 0.0
      %202 = vmatpush1.msra.mxu0 0.0
      %203 = vmatprep.subr.mxu0 0.0
      %204 = vmatpush1.msra.mxu0 0.0
      %205 = vmatprep.subr.mxu0 0.0
      %206 = vmatpush1.msra.mxu0 0.0
      %207 = vmatprep.subr.mxu0 0.0
      %208 = vmatpush1.msra.mxu0 0.0
      %209 = vmatprep.subr.mxu0 0.0
      %210 = vmatpush1.msra.mxu0 0.0
      %211 = vmatprep.subr.mxu0 0.0
      %212 = vmatpush1.msra.mxu0 0.0
      %213 = vmatprep.subr.mxu0 0.0
      %214 = vmatpush1.msra.mxu0 0.0
      %215 = vmatprep.subr.mxu0 0.0
      %216 = vmatpush1.msra.mxu0 0.0
      %217 = vmatprep.subr.mxu0 0.0
      %218 = vmatpush1.msra.mxu0 0.0
      %219 = vmatprep.subr.mxu0 0.0
      %220 = vmatpush1.msra.mxu0 0.0
      %221 = vmatprep.subr.mxu0 0.0
      %222 = vmatpush1.msra.mxu0 0.0
      %223 = vmatprep.subr.mxu0 0.0
      %224 = vmatpush1.msra.mxu0 0.0
      %225 = vmatprep.subr.mxu0 0.0
      %226 = vmatpush1.msra.mxu0 0.0
      %227 = vmatprep.subr.mxu0 0.0
      %228 = vmatpush1.msra.mxu0 0.0
      %229 = vmatprep.subr.mxu0 0.0
      %230 = vmatpush1.msra.mxu0 0.0
      %231 = vmatprep.subr.mxu0 0.0
      %232 = vmatpush1.msra.mxu0 0.0
      %233 = vmatprep.subr.mxu0 0.0
      %234 = vmatpush1.msra.mxu0 0.0
      %235 = vmatprep.subr.mxu0 0.0
      %236 = vmatpush1.msra.mxu0 0.0
      %237 = vmatprep.subr.mxu0 0.0
      %238 = vmatpush1.msra.mxu0 0.0
      %239 = vmatprep.subr.mxu0 0.0
      %240 = vmatpush1.msra.mxu0 0.0
      %241 = vmatprep.subr.mxu0 0.0
      %242 = vmatpush1.msra.mxu0 0.0
      %243 = vmatprep.subr.mxu0 0.0
      %244 = vmatpush1.msra.mxu0 0.0
      %245 = vmatprep.subr.mxu0 0.0
      %246 = vmatpush1.msra.mxu0 0.0
      %247 = vmatprep.subr.mxu0 0.0
      %248 = vmatpush1.msra.mxu0 0.0
      %249 = vmatprep.subr.mxu0 0.0
      %250 = vmatpush1.msra.mxu0 0.0
      %251 = vmatprep.subr.mxu0 0.0
      %252 = vmatpush1.msra.mxu0 0.0
      %253 = vmatprep.subr.mxu0 0.0
      %254 = vmatpush1.msra.mxu0 0.0
      %255 = vmatprep.subr.mxu0 0.0
      %256 = vmatpush1.msra.mxu0 0.0
      %257 = vmatprep.subr.mxu0 0.0
      %258 = vmatpush1.msra.mxu0 0.0
      %259 = vmatprep.mubr.f32.mxu0 0.0
      %260 = vmatmul.mubr.f32.gmra.mrb[0].mxu0 %v190
      %v261 = vpop.f32.mrb[0].mxu0
      %v262 = vadd.f32 0.0, %v261
      %v263 = vpop.f32.mrb[0].mxu0
      %264 = vmatprep.mubr.f32.mxu0 0.0
      %265 = vmatmul.mubr.f32.gmra.mrb[0].mxu0 %v193
      %v266 = vpop.f32.mrb[0].mxu0
      %v267 = vadd.f32 0.0, %v266
      %v268 = vpop.f32.mrb[0].mxu0
      %269 = vdwg.mxu0
      %v270 = vld [vmem:[#allocation2] sm:$0xff]
      %v271 = vld [vmem:[#allocation2 + $0x8] sm:$0xff]
      %v272 = vadd.f32 %v270, %v262
      %v273 = vadd.f32 %v271, %v267
      %v274 = vld [vmem:[%s4] sm:$0x1]
      %v276 = vlaneseq
      %v277 = vshrl.u32 %v276, 7
      %v278 = vsub.s32 0, %v277
      %v279 = vrot.slane %v274, %v278
      %v281 = vadd.f32 %v272, %v279
      %v282 = vadd.f32 %v273, %v279
      %283 = vst [vmem:[#allocation11] sm:$0xff] %v281
      %284 = vst [vmem:[#allocation11 + $0x8] sm:$0xff] %v282
    $region45: #{tpu_custom_call.1} parent=1 // pred_fallthru
      _
    // Predicated region
    $region46: #{tpu_custom_call.1} parent=1 // pred_check
      _
    $region47: #{tpu_custom_call.1} parent=1 // pred_check_branch
      %286 = sbr.rel (0) target = $region49
    $region48: #{tpu_custom_call.1} parent=1 // pred_region
      %s288 = ssub.s32 256, 256
      %289 = vsyncadd [#allocation5], %s288
      %s290 = sshll.u32 [#allocation11], 4
      %s291 = int_to_ptr.vmem [resolvable:$true] %s290
      %296 = dma.vmem_to_hbm [thread:$0]  %s291, 256, %s5, [#allocation5], 128, 128, 8
    $region49: #{tpu_custom_call.1} parent=1 // pred_fallthru
      _
    // Predicated region
    $region50: #{tpu_custom_call.1} parent=1 // pred_check
      _
    $region51: #{tpu_custom_call.1} parent=1 // pred_check_branch
      %298 = sbr.rel (0) target = $region53
    $region52: #{tpu_custom_call.1} parent=1 // pred_region
      %299 = dma.done [#allocation5], 256
    $region53: #{tpu_custom_call.1} parent=1 // pred_fallthru
      _
    %300 = vsyncpa [#allocation4], 1
    %301 = vsyncpa [#allocation7], 1
    %302 = vsyncpa [#allocation10], 1
    %303 = vsyncpa [#allocation5], 1

</llo_original>
